<compile_context>
chip_gen: v7x
topology: tpu7x:2x2x1
jax: 0.10.0
libtpu: 0.0.40
codegen_flags: <defaults>
</compile_context>

<pallas_src>
import jax
import jax.numpy as jnp
import numpy as np
from jax import lax
from jax.experimental import pallas as pl
from jax.experimental.pallas import tpu as pltpu

BN_EPS = 1e-5


def transform_kernel(x_ref, w_ref, b_ref, g_ref, beta_ref, o_ref):
    # x_ref: (B, dim, tn) bf16/f32   w_ref: (dim, dim)   b_ref: (dim, 1) f32
    # g_ref/beta_ref: (1, tn) f32    o_ref: (B, dim, tn)
    B, dim, tn = x_ref.shape
    w = w_ref[...]
    bias = b_ref[...].astype(jnp.float32)                  # (dim, 1) -> broadcast over lanes

    # One wide MXU call over all batches: RHS = [x[0] | x[1] | ...]  -> (dim, B*tn).
    if B > 1:
        x_wide = jnp.concatenate([x_ref[b] for b in range(B)], axis=-1)
    else:
        x_wide = x_ref[0]
    z = jnp.dot(w, x_wide, preferred_element_type=jnp.float32) + bias   # (dim, B*tn) f32

    # Single-pass BN stats per lane-channel n (reduced over batch & dim),
    # staging the pre-BN result directly in the output block (no scratch).
    s1 = jnp.zeros((1, tn), jnp.float32)
    s2 = jnp.zeros((1, tn), jnp.float32)
    for b in range(B):                                     # B is small & static
        zb = z[:, b * tn:(b + 1) * tn]                     # tile-aligned static slice
        o_ref[b] = zb.astype(o_ref.dtype)
        s1 = s1 + jnp.sum(zb, axis=0, keepdims=True)
        s2 = s2 + jnp.sum(zb * zb, axis=0, keepdims=True)

    inv_cnt = 1.0 / float(B * dim)
    mean = s1 * inv_cnt                                    # (1, tn)
    var = s2 * inv_cnt - mean * mean                       # biased var (training-mode BN)
    inv = lax.rsqrt(var + BN_EPS)
    scale = g_ref[...] * inv                               # (1, tn)
    shift = beta_ref[...] - mean * scale

    for b in range(B):
        zb = o_ref[b].astype(jnp.float32)
        o_ref[b] = (zb * scale + shift).astype(o_ref.dtype)


def _default_tile_n(N):
    """Full-N tile (grid of 1) on single-TC chips; 2-wide parallel grid on v7x."""
    tn = N
    try:
        kind = jax.devices()[0].device_kind.lower()
        if "7" in kind and N % 256 == 0 and (N // 2) % 128 == 0:
            tn = N // 2                                    # feed both TensorCores
    except Exception:
        pass
    return tn


def transform_forward(x, w, bias, gamma, beta, *, tn=None, use_bf16_matmul=True):
    """x: [B, dim, N] (matches PyTorch [B, dim, 512]); returns same shape/dtype."""
    B, dim, N = x.shape
    if tn is None:
        tn = _default_tile_n(N)
    assert N % tn == 0 and (tn == N or tn % 128 == 0)

    out_dtype = x.dtype
    mm_dtype = jnp.bfloat16 if use_bf16_matmul else x.dtype
    x_mm = x.astype(mm_dtype)
    w_mm = w.astype(mm_dtype)
    bias2 = bias.astype(jnp.float32).reshape(dim, 1)
    gamma2 = gamma.astype(jnp.float32).reshape(1, N)
    beta2 = beta.astype(jnp.float32).reshape(1, N)

    return pl.pallas_call(
        transform_kernel,
        out_shape=jax.ShapeDtypeStruct((B, dim, N), out_dtype),
        grid_spec=pltpu.PrefetchScalarGridSpec(
            num_scalar_prefetch=0,
            grid=(N // tn,),
            in_specs=[
                pl.BlockSpec((B, dim, tn), lambda j: (0, 0, j)),   # x
                pl.BlockSpec((dim, dim), lambda j: (0, 0)),        # W   (grid-invariant)
                pl.BlockSpec((dim, 1), lambda j: (0, 0)),          # bias (grid-invariant)
                pl.BlockSpec((1, tn), lambda j: (0, j)),           # gamma
                pl.BlockSpec((1, tn), lambda j: (0, j)),           # beta
            ],
            out_specs=pl.BlockSpec((B, dim, tn), lambda j: (0, 0, j)),
        ),
        compiler_params=pltpu.CompilerParams(
            dimension_semantics=("parallel",)),
    )(x_mm, w_mm, bias2, gamma2, beta2)


def reference(x, w, bias, gamma, beta):
    # Pure-JAX mirror of the PyTorch forward (training-mode BN, batch stats).
    t = jnp.swapaxes(x, -1, -2)                      # (B, N, dim)
    y = t @ w.T + bias                               # Linear(dim, dim)
    mean = jnp.mean(y, axis=(0, 2), keepdims=True)   # per-channel over (B, dim)
    var = jnp.mean((y - mean) ** 2, axis=(0, 2), keepdims=True)
    yn = gamma[None, :, None] * (y - mean) / jnp.sqrt(var + BN_EPS) \
        + beta[None, :, None]
    return jnp.swapaxes(yn, -1, -2)


if __name__ == "__main__":
    key = jax.random.PRNGKey(0)
    B, dim, N = 2, 32, 512            # N=512 matches the hard-coded BatchNorm1d(512)
    kx, kw, kb, kg, kbe = jax.random.split(key, 5)

    x = jax.random.normal(kx, (B, dim, N), jnp.float32)
    bound = 1.0 / (dim ** 0.5)
    w = jax.random.uniform(kw, (dim, dim), jnp.float32, -bound, bound)
    bias = jax.random.uniform(kb, (dim,), jnp.float32, -bound, bound)
    gamma = 1.0 + 0.1 * jax.random.normal(kg, (N,), jnp.float32)
    beta = 0.1 * jax.random.normal(kbe, (N,), jnp.float32)

    out = jax.block_until_ready(transform_forward(x, w, bias, gamma, beta))
    assert out.shape == x.shape and out.dtype == x.dtype

    # Tight check vs a reference fed the same bf16-rounded matmul inputs
    # (validates the kernel's matmul + single-pass BN math).
    x_r = x.astype(jnp.bfloat16).astype(jnp.float32)
    w_r = w.astype(jnp.bfloat16).astype(jnp.float32)
    ref_matched = jax.block_until_ready(reference(x_r, w_r, bias, gamma, beta))
    np.testing.assert_allclose(np.asarray(out), np.asarray(ref_matched),
                               atol=2e-3, rtol=2e-3)

    # Loose sanity check vs the exact f32 module (bf16 MXU inputs add ~1e-2 noise).
    ref = jax.block_until_ready(reference(x, w, bias, gamma, beta))
    np.testing.assert_allclose(np.asarray(out), np.asarray(ref),
                               atol=5e-2, rtol=5e-2)

    print("KERNEL_OK")
</pallas_src>

<mosaic_0001>
module attributes {stable_mosaic.version = 11 : i64} {
  func.func @transform_kernel(%arg0: i32, %arg1: memref<2x32x512xbf16, #tpu.memory_space<vmem>>, %arg2: memref<32x32xbf16, #tpu.memory_space<vmem>>, %arg3: memref<32x1xf32, #tpu.memory_space<vmem>>, %arg4: memref<1x512xf32, #tpu.memory_space<vmem>>, %arg5: memref<1x512xf32, #tpu.memory_space<vmem>>, %arg6: memref<2x32x512xf32, #tpu.memory_space<vmem>>) attributes {dimension_semantics = [#tpu.dimension_semantics<parallel>], iteration_bounds = array<i64: 1>, scalar_prefetch = 0 : i64, scratch_operands = 0 : i64, tpu.core_type = #tpu.core_type<tc>, window_params = [{transform_indices = @transform_0, window_bounds = array<i64: 2, 32, 512>}, {pipeline_mode = #tpu.pipeline_mode<synchronous>, transform_indices = @transform_1, window_bounds = array<i64: 32, 32>}, {pipeline_mode = #tpu.pipeline_mode<synchronous>, transform_indices = @transform_2, window_bounds = array<i64: 32, 1>}, {transform_indices = @transform_3, window_bounds = array<i64: 1, 512>}, {transform_indices = @transform_4, window_bounds = array<i64: 1, 512>}, {transform_indices = @transform_5, window_bounds = array<i64: 2, 32, 512>}]} {
    %c0 = arith.constant 0 : index
    %c0_0 = arith.constant 0 : index
    %0 = vector.load %arg2[%c0, %c0_0] : memref<32x32xbf16, #tpu.memory_space<vmem>>, vector<32x32xbf16>
    %c0_1 = arith.constant 0 : index
    %c0_2 = arith.constant 0 : index
    %1 = vector.load %arg3[%c0_1, %c0_2] : memref<32x1xf32, #tpu.memory_space<vmem>>, vector<32x1xf32>
    %c0_3 = arith.constant 0 : index
    %c0_4 = arith.constant 0 : index
    %c0_5 = arith.constant 0 : index
    %2 = vector.load %arg1[%c0_3, %c0_4, %c0_5] : memref<2x32x512xbf16, #tpu.memory_space<vmem>>, vector<1x32x512xbf16>
    %3 = vector.shape_cast %2 : vector<1x32x512xbf16> to vector<32x512xbf16>
    %c1 = arith.constant 1 : index
    %c0_6 = arith.constant 0 : index
    %c0_7 = arith.constant 0 : index
    %4 = vector.load %arg1[%c1, %c0_6, %c0_7] : memref<2x32x512xbf16, #tpu.memory_space<vmem>>, vector<1x32x512xbf16>
    %5 = vector.shape_cast %4 : vector<1x32x512xbf16> to vector<32x512xbf16>
    %6 = tpu.concatenate %3, %5 in 1 : vector<32x512xbf16>, vector<32x512xbf16> -> vector<32x1024xbf16>
    %cst = arith.constant dense<0.000000e+00> : vector<32x1024xf32>
    %7 = tpu.matmul %0, %6, %cst {dimension_numbers = #tpu.dot_dimension_numbers<[1], [0], [0], [1], [0, 0, 1, 1], [], []>} : vector<32x32xbf16>, vector<32x1024xbf16>, vector<32x1024xf32> -> vector<32x1024xf32>
    %8 = vector.broadcast %1 : vector<32x1xf32> to vector<32x1024xf32>
    %9 = arith.addf %7, %8 : vector<32x1024xf32>
    %cst_8 = arith.constant 0.000000e+00 : f32
    %10 = vector.broadcast %cst_8 : f32 to vector<1x512xf32>
    %cst_9 = arith.constant 0.000000e+00 : f32
    %11 = vector.broadcast %cst_9 : f32 to vector<1x512xf32>
    %12 = vector.extract_strided_slice %9 {offsets = [0, 0], sizes = [32, 512], strides = [1, 1]} : vector<32x1024xf32> to vector<32x512xf32>
    %c0_10 = arith.constant 0 : index
    %c0_11 = arith.constant 0 : index
    %c0_12 = arith.constant 0 : index
    %13 = vector.load %arg6[%c0_10, %c0_11, %c0_12] : memref<2x32x512xf32, #tpu.memory_space<vmem>>, vector<1x32x512xf32>
    %14 = vector.shape_cast %13 : vector<1x32x512xf32> to vector<32x512xf32>
    %15 = vector.shape_cast %12 : vector<32x512xf32> to vector<1x32x512xf32>
    tpu.vector_store %arg6[%c0_10, %c0_11, %c0_12], %15 {strides = array<i32>} : memref<2x32x512xf32, #tpu.memory_space<vmem>>, vector<1x32x512xf32>,
    %cst_13 = arith.constant dense<0.000000e+00> : vector<512xf32>
    %16 = vector.multi_reduction <add>, %12, %cst_13 [0] : vector<32x512xf32> to vector<512xf32>
    %17 = vector.shape_cast %16 : vector<512xf32> to vector<1x512xf32>
    %18 = arith.addf %10, %17 : vector<1x512xf32>
    %19 = arith.mulf %12, %12 : vector<32x512xf32>
    %cst_14 = arith.constant dense<0.000000e+00> : vector<512xf32>
    %20 = vector.multi_reduction <add>, %19, %cst_14 [0] : vector<32x512xf32> to vector<512xf32>
    %21 = vector.shape_cast %20 : vector<512xf32> to vector<1x512xf32>
    %22 = arith.addf %11, %21 : vector<1x512xf32>
    %23 = vector.extract_strided_slice %9 {offsets = [0, 512], sizes = [32, 512], strides = [1, 1]} : vector<32x1024xf32> to vector<32x512xf32>
    %c1_15 = arith.constant 1 : index
    %c0_16 = arith.constant 0 : index
    %c0_17 = arith.constant 0 : index
    %24 = vector.load %arg6[%c1_15, %c0_16, %c0_17] : memref<2x32x512xf32, #tpu.memory_space<vmem>>, vector<1x32x512xf32>
    %25 = vector.shape_cast %24 : vector<1x32x512xf32> to vector<32x512xf32>
    %26 = vector.shape_cast %23 : vector<32x512xf32> to vector<1x32x512xf32>
    tpu.vector_store %arg6[%c1_15, %c0_16, %c0_17], %26 {strides = array<i32>} : memref<2x32x512xf32, #tpu.memory_space<vmem>>, vector<1x32x512xf32>,
    %cst_18 = arith.constant dense<0.000000e+00> : vector<512xf32>
    %27 = vector.multi_reduction <add>, %23, %cst_18 [0] : vector<32x512xf32> to vector<512xf32>
    %28 = vector.shape_cast %27 : vector<512xf32> to vector<1x512xf32>
    %29 = arith.addf %18, %28 : vector<1x512xf32>
    %30 = arith.mulf %23, %23 : vector<32x512xf32>
    %cst_19 = arith.constant dense<0.000000e+00> : vector<512xf32>
    %31 = vector.multi_reduction <add>, %30, %cst_19 [0] : vector<32x512xf32> to vector<512xf32>
    %32 = vector.shape_cast %31 : vector<512xf32> to vector<1x512xf32>
    %33 = arith.addf %22, %32 : vector<1x512xf32>
    %cst_20 = arith.constant 1.562500e-02 : f32
    %34 = vector.broadcast %cst_20 : f32 to vector<1x512xf32>
    %35 = arith.mulf %29, %34 : vector<1x512xf32>
    %cst_21 = arith.constant 1.562500e-02 : f32
    %36 = vector.broadcast %cst_21 : f32 to vector<1x512xf32>
    %37 = arith.mulf %33, %36 : vector<1x512xf32>
    %38 = arith.mulf %35, %35 : vector<1x512xf32>
    %39 = arith.subf %37, %38 : vector<1x512xf32>
    %cst_22 = arith.constant 9.99999974E-6 : f32
    %40 = vector.broadcast %cst_22 : f32 to vector<1x512xf32>
    %41 = arith.addf %39, %40 : vector<1x512xf32>
    %42 = math.rsqrt %41 : vector<1x512xf32>
    %c0_23 = arith.constant 0 : index
    %c0_24 = arith.constant 0 : index
    %43 = vector.load %arg4[%c0_23, %c0_24] : memref<1x512xf32, #tpu.memory_space<vmem>>, vector<1x512xf32>
    %44 = arith.mulf %43, %42 : vector<1x512xf32>
    %c0_25 = arith.constant 0 : index
    %c0_26 = arith.constant 0 : index
    %45 = vector.load %arg5[%c0_25, %c0_26] : memref<1x512xf32, #tpu.memory_space<vmem>>, vector<1x512xf32>
    %46 = arith.mulf %35, %44 : vector<1x512xf32>
    %47 = arith.subf %45, %46 : vector<1x512xf32>
    %c0_27 = arith.constant 0 : index
    %c0_28 = arith.constant 0 : index
    %c0_29 = arith.constant 0 : index
    %48 = vector.load %arg6[%c0_27, %c0_28, %c0_29] : memref<2x32x512xf32, #tpu.memory_space<vmem>>, vector<1x32x512xf32>
    %49 = vector.shape_cast %48 : vector<1x32x512xf32> to vector<32x512xf32>
    %50 = vector.broadcast %44 : vector<1x512xf32> to vector<32x512xf32>
    %51 = arith.mulf %49, %50 : vector<32x512xf32>
    %52 = vector.broadcast %47 : vector<1x512xf32> to vector<32x512xf32>
    %53 = arith.addf %51, %52 : vector<32x512xf32>
    %c0_30 = arith.constant 0 : index
    %c0_31 = arith.constant 0 : index
    %c0_32 = arith.constant 0 : index
    %54 = vector.load %arg6[%c0_30, %c0_31, %c0_32] : memref<2x32x512xf32, #tpu.memory_space<vmem>>, vector<1x32x512xf32>
    %55 = vector.shape_cast %54 : vector<1x32x512xf32> to vector<32x512xf32>
    %56 = vector.shape_cast %53 : vector<32x512xf32> to vector<1x32x512xf32>
    tpu.vector_store %arg6[%c0_30, %c0_31, %c0_32], %56 {strides = array<i32>} : memref<2x32x512xf32, #tpu.memory_space<vmem>>, vector<1x32x512xf32>,
    %c1_33 = arith.constant 1 : index
    %c0_34 = arith.constant 0 : index
    %c0_35 = arith.constant 0 : index
    %57 = vector.load %arg6[%c1_33, %c0_34, %c0_35] : memref<2x32x512xf32, #tpu.memory_space<vmem>>, vector<1x32x512xf32>
    %58 = vector.shape_cast %57 : vector<1x32x512xf32> to vector<32x512xf32>
    %59 = vector.broadcast %44 : vector<1x512xf32> to vector<32x512xf32>
    %60 = arith.mulf %58, %59 : vector<32x512xf32>
    %61 = vector.broadcast %47 : vector<1x512xf32> to vector<32x512xf32>
    %62 = arith.addf %60, %61 : vector<32x512xf32>
    %c1_36 = arith.constant 1 : index
    %c0_37 = arith.constant 0 : index
    %c0_38 = arith.constant 0 : index
    %63 = vector.load %arg6[%c1_36, %c0_37, %c0_38] : memref<2x32x512xf32, #tpu.memory_space<vmem>>, vector<1x32x512xf32>
    %64 = vector.shape_cast %63 : vector<1x32x512xf32> to vector<32x512xf32>
    %65 = vector.shape_cast %62 : vector<32x512xf32> to vector<1x32x512xf32>
    tpu.vector_store %arg6[%c1_36, %c0_37, %c0_38], %65 {strides = array<i32>} : memref<2x32x512xf32, #tpu.memory_space<vmem>>, vector<1x32x512xf32>,
    return
  }
  func.func @transform_0(%arg0: i32) -> (i32, i32, i32) {
    %c0_i32 = arith.constant 0 : i32
    %c0_i32_0 = arith.constant 0 : i32
    %c0_i32_1 = arith.constant 0 : i32
    return %c0_i32, %c0_i32_0, %arg0 : i32, i32, i32
  }
  func.func @transform_1(%arg0: i32) -> (i32, i32) {
    %c0_i32 = arith.constant 0 : i32
    %c0_i32_0 = arith.constant 0 : i32
    %c0_i32_1 = arith.constant 0 : i32
    return %c0_i32, %c0_i32_0 : i32, i32
  }
  func.func @transform_2(%arg0: i32) -> (i32, i32) {
    %c0_i32 = arith.constant 0 : i32
    %c0_i32_0 = arith.constant 0 : i32
    %c0_i32_1 = arith.constant 0 : i32
    return %c0_i32, %c0_i32_0 : i32, i32
  }
  func.func @transform_3(%arg0: i32) -> (i32, i32) {
    %c0_i32 = arith.constant 0 : i32
    %c0_i32_0 = arith.constant 0 : i32
    return %c0_i32, %arg0 : i32, i32
  }
  func.func @transform_4(%arg0: i32) -> (i32, i32) {
    %c0_i32 = arith.constant 0 : i32
    %c0_i32_0 = arith.constant 0 : i32
    return %c0_i32, %arg0 : i32, i32
  }
  func.func @transform_5(%arg0: i32) -> (i32, i32, i32) {
    %c0_i32 = arith.constant 0 : i32
    %c0_i32_0 = arith.constant 0 : i32
    %c0_i32_1 = arith.constant 0 : i32
    return %c0_i32, %c0_i32_0, %arg0 : i32, i32, i32
  }
}

</mosaic_0001>

<llo_original>
// kernel: tpu_custom_call.1
$region0: #{tpu_custom_call.1}
  #allocation0 [shape = 'u32[]', space=smem, size = 0x4, offset = 0x4, fixed_abs, tag = 'smem constant byte address 0x4 - core index']
  #allocation1 [shape = 'u32[144,128]{1,0:T(1,128)}', space=vmem, size = 0x12000, scoped, tag = 'internal scratch']
  %s0 = inlined_call_operand.hbm [shape: bf16[2,32,512], index: 0, kind: input, shape index: {}]
  %s1 = inlined_call_operand.vmem [shape: bf16[32,32], index: 1, kind: input, shape index: {}]
  %s2 = inlined_call_operand.vmem [shape: f32[32,1], index: 2, kind: input, shape index: {}]
  %s3 = inlined_call_operand.vmem [shape: f32[1,512], index: 3, kind: input, shape index: {}]
  %s4 = inlined_call_operand.vmem [shape: f32[1,512], index: 4, kind: input, shape index: {}]
  %s5 = inlined_call_operand.hbm [shape: f32[2,32,512], index: 5, kind: output, shape index: {}]
  %s6 = sld [smem:[#allocation0]]
  $region34: #{tpu_custom_call.1} parent=0
    _
  %s8 = ssub.s32 1, %s6
  %s9 = scalar_select 0, %s8, %s6
  $region1: #{tpu_custom_call.1} parent=0
    #allocation2 [shape = 'u8[65536]{0}', space=vmem, size = 0x10000, scoped, tag = 'input window, operand 0, single buffered']
    #allocation3 [shape = 's32[1]{0}', space=sflag, size = 0x4, scoped, tag = 'scoped memory for tpu_custom_call.1']
    #allocation4 [shape = 's32[1]{0}', space=sflag, size = 0x4, scoped, tag = 'scoped memory for tpu_custom_call.1']
    #allocation5 [shape = 'u8[131072]{0}', space=vmem, size = 0x20000, scoped, tag = 'output window, operand 0, single buffered']
    %10 = vsyncpa [#allocation3], 0
    %11 = vsyncpa [#allocation4], 0
    // Predicated region
    $region2: #{tpu_custom_call.1} parent=1 // pred_check
      _
    $region3: #{tpu_custom_call.1} parent=1 // pred_check_branch
      %13 = sbr.rel (0) target = $region5
    $region4: #{tpu_custom_call.1} parent=1 // pred_region
      %s15 = ssub.s32 2048, 2048
      %16 = vsyncadd [#allocation3], %s15
      %s17 = sshll.u32 [#allocation2], 4
      %s18 = int_to_ptr.vmem [resolvable:$true] %s17
      %23 = dma.hbm_to_vmem [thread:$0]  %s0, 2048, %s18, [#allocation3], 256, 256, 16
    $region5: #{tpu_custom_call.1} parent=1 // pred_fallthru
      _
    // Predicated region
    $region6: #{tpu_custom_call.1} parent=1 // pred_check
      _
    $region7: #{tpu_custom_call.1} parent=1 // pred_check_branch
      %25 = sbr.rel (0) target = $region9
    $region8: #{tpu_custom_call.1} parent=1 // pred_region
      _
    $region9: #{tpu_custom_call.1} parent=1 // pred_fallthru
      _
    // Predicated region
    $region10: #{tpu_custom_call.1} parent=1 // pred_check
      _
    $region11: #{tpu_custom_call.1} parent=1 // pred_check_branch
      %27 = sbr.rel (0) target = $region13
    $region12: #{tpu_custom_call.1} parent=1 // pred_region
      _
    $region13: #{tpu_custom_call.1} parent=1 // pred_fallthru
      _
    // Predicated region
    $region14: #{tpu_custom_call.1} parent=1 // pred_check
      _
    $region15: #{tpu_custom_call.1} parent=1 // pred_check_branch
      %29 = sbr.rel (0) target = $region17
    $region16: #{tpu_custom_call.1} parent=1 // pred_region
      _
    $region17: #{tpu_custom_call.1} parent=1 // pred_fallthru
      _
    // Predicated region
    $region18: #{tpu_custom_call.1} parent=1 // pred_check
      _
    $region19: #{tpu_custom_call.1} parent=1 // pred_check_branch
      %31 = sbr.rel (0) target = $region21
    $region20: #{tpu_custom_call.1} parent=1 // pred_region
      _
    $region21: #{tpu_custom_call.1} parent=1 // pred_fallthru
      _
    // Predicated region
    $region22: #{tpu_custom_call.1} parent=1 // pred_check
      _
    $region23: #{tpu_custom_call.1} parent=1 // pred_check_branch
      %33 = sbr.rel (0) target = $region25
    $region24: #{tpu_custom_call.1} parent=1 // pred_region
      %34 = dma.done [#allocation3], 2048
    $region25: #{tpu_custom_call.1} parent=1 // pred_fallthru
      _
    %v36 = vld [vmem:[%s1] sm:$0xf]
    %v37 = vld [vmem:[%s1 + $0x4] sm:$0xf]
    %v38 = vld [vmem:[%s1 + $0x8] sm:$0xf]
    %v39 = vld [vmem:[%s1 + $0xc] sm:$0xf]
    %v40 = vld [vmem:[%s2] sm:$0xff]
    %v41 = vld [vmem:[%s2 + $0x8] sm:$0xff]
    %v42 = vld [vmem:[%s2 + $0x10] sm:$0xff]
    %v43 = vld [vmem:[%s2 + $0x18] sm:$0xff]
    %v44 = vld [vmem:[#allocation2] sm:$0xff]
    %v45 = vld [vmem:[#allocation2 + $0x8] sm:$0xff]
    %v46 = vld [vmem:[#allocation2 + $0x10] sm:$0xff]
    %v47 = vld [vmem:[#allocation2 + $0x18] sm:$0xff]
    %v48 = vld [vmem:[#allocation2 + $0x20] sm:$0xff]
    %v49 = vld [vmem:[#allocation2 + $0x28] sm:$0xff]
    %v50 = vld [vmem:[#allocation2 + $0x30] sm:$0xff]
    %v51 = vld [vmem:[#allocation2 + $0x38] sm:$0xff]
    %s52 = scalar_lea.vmem [#allocation2], 64
    %v53 = vld [vmem:[%s52] sm:$0xff]
    %v54 = vld [vmem:[%s52 + $0x8] sm:$0xff]
    %v55 = vld [vmem:[%s52 + $0x10] sm:$0xff]
    %v56 = vld [vmem:[%s52 + $0x18] sm:$0xff]
    %v57 = vld [vmem:[%s52 + $0x20] sm:$0xff]
    %v58 = vld [vmem:[%s52 + $0x28] sm:$0xff]
    %v59 = vld [vmem:[%s52 + $0x30] sm:$0xff]
    %v60 = vld [vmem:[%s52 + $0x38] sm:$0xff]
    %v69 = vunpack.c.l.b16 %v44
    %v70 = vunpack.c.h.b16 %v44
    %v71 = vunpack.c.l.b16 %v45
    %v72 = vunpack.c.h.b16 %v45
    %v73 = vunpack.c.l.b16 %v46
    %v74 = vunpack.c.h.b16 %v46
    %v75 = vunpack.c.l.b16 %v47
    %v76 = vunpack.c.h.b16 %v47
    %v77 = vunpack.c.l.b16 %v48
    %v78 = vunpack.c.h.b16 %v48
    %v79 = vunpack.c.l.b16 %v49
    %v80 = vunpack.c.h.b16 %v49
    %v81 = vunpack.c.l.b16 %v50
    %v82 = vunpack.c.h.b16 %v50
    %v83 = vunpack.c.l.b16 %v51
    %v84 = vunpack.c.h.b16 %v51
    %v85 = vpack.c.b16 %v73, %v69
    %v86 = vpack.c.b16 %v74, %v70
    %v87 = vpack.c.b16 %v75, %v71
    %v88 = vpack.c.b16 %v76, %v72
    %v89 = vpack.c.b16 %v81, %v77
    %v90 = vpack.c.b16 %v82, %v78
    %v91 = vpack.c.b16 %v83, %v79
    %v92 = vpack.c.b16 %v84, %v80
    %v109 = vunpack.c.l.b16 %v53
    %v110 = vunpack.c.h.b16 %v53
    %v111 = vunpack.c.l.b16 %v54
    %v112 = vunpack.c.h.b16 %v54
    %v113 = vunpack.c.l.b16 %v55
    %v114 = vunpack.c.h.b16 %v55
    %v115 = vunpack.c.l.b16 %v56
    %v116 = vunpack.c.h.b16 %v56
    %v117 = vunpack.c.l.b16 %v57
    %v118 = vunpack.c.h.b16 %v57
    %v119 = vunpack.c.l.b16 %v58
    %v120 = vunpack.c.h.b16 %v58
    %v121 = vunpack.c.l.b16 %v59
    %v122 = vunpack.c.h.b16 %v59
    %v123 = vunpack.c.l.b16 %v60
    %v124 = vunpack.c.h.b16 %v60
    %v125 = vpack.c.b16 %v113, %v109
    %v126 = vpack.c.b16 %v114, %v110
    %v127 = vpack.c.b16 %v115, %v111
    %v128 = vpack.c.b16 %v116, %v112
    %v129 = vpack.c.b16 %v121, %v117
    %v130 = vpack.c.b16 %v122, %v118
    %v131 = vpack.c.b16 %v123, %v119
    %v132 = vpack.c.b16 %v124, %v120
    %142 = vset.pattern.permute.xlu0 0
    %143 = vperm.xlu0 %142, %v40
    %v144 = vpop.permute.xlu0 %143
    %147 = vset.pattern.permute.xlu0 0
    %148 = vperm.xlu0 %147, %v41
    %v149 = vpop.permute.xlu0 %148
    %152 = vset.pattern.permute.xlu0 0
    %153 = vperm.xlu0 %152, %v42
    %v154 = vpop.permute.xlu0 %153
    %157 = vset.pattern.permute.xlu0 0
    %158 = vperm.xlu0 %157, %v43
    %v159 = vpop.permute.xlu0 %158
    %v165 = vunpack.c.l.b16 %v36
    %v166 = vunpack.c.l.b16 %v37
    %v167 = vunpack.c.l.b16 %v38
    %v168 = vunpack.c.l.b16 %v39
    %v169 = vpack.c.b16 %v166, %v165
    %v170 = vpack.c.b16 %v168, %v167
    %vm171 = vcmask 261120
    %v173 = vsel %vm171, %v169, 0
    %v176 = vsel %vm171, %v170, 0
    %178 = vmatprep.subr.bf16.mxu0 %v86
    %179 = vmatpush1.bf16.msra.mxu0 %v85
    %180 = vmatprep.subr.bf16.mxu0 %v90
    %181 = vmatpush1.bf16.msra.mxu0 %v89
    %182 = vmatprep.subr.bf16.mxu0 0
    %183 = vmatpush1.bf16.msra.mxu0 0
    %184 = vmatprep.subr.bf16.mxu0 0
    %185 = vmatpush1.bf16.msra.mxu0 0
    %186 = vmatprep.subr.bf16.mxu0 0
    %187 = vmatpush1.bf16.msra.mxu0 0
    %188 = vmatprep.subr.bf16.mxu0 0
    %189 = vmatpush1.bf16.msra.mxu0 0
    %190 = vmatprep.subr.bf16.mxu0 0
    %191 = vmatpush1.bf16.msra.mxu0 0
    %192 = vmatprep.subr.bf16.mxu0 0
    %193 = vmatpush1.bf16.msra.mxu0 0
    %194 = vmatprep.subr.bf16.mxu0 0
    %195 = vmatpush1.bf16.msra.mxu0 0
    %196 = vmatprep.subr.bf16.mxu0 0
    %197 = vmatpush1.bf16.msra.mxu0 0
    %198 = vmatprep.subr.bf16.mxu0 0
    %199 = vmatpush1.bf16.msra.mxu0 0
    %200 = vmatprep.subr.bf16.mxu0 0
    %201 = vmatpush1.bf16.msra.mxu0 0
    %202 = vmatprep.subr.bf16.mxu0 0
    %203 = vmatpush1.bf16.msra.mxu0 0
    %204 = vmatprep.subr.bf16.mxu0 0
    %205 = vmatpush1.bf16.msra.mxu0 0
    %206 = vmatprep.subr.bf16.mxu0 0
    %207 = vmatpush1.bf16.msra.mxu0 0
    %208 = vmatprep.subr.bf16.mxu0 0
    %209 = vmatpush1.bf16.msra.mxu0 0
    %210 = vmatprep.mubr.bf16.mxu0 0
    %211 = vmatmul.mubr.bf16.gmra.mrb[0].mxu0 %v173
    %v212 = vpop.f32.mrb[0].mxu0
    %v213 = vadd.f32 %v144, %v212
    %v214 = vpop.f32.mrb[0].mxu0
    %v215 = vadd.f32 %v144, %v214
    %v216 = vpop.f32.mrb[0].mxu0
    %v217 = vadd.f32 %v149, %v216
    %v218 = vpop.f32.mrb[0].mxu0
    %v219 = vadd.f32 %v149, %v218
    %220 = vmatprep.mubr.bf16.mxu0 0
    %221 = vmatmul.mubr.bf16.gmra.mrb[0].mxu0 %v176
    %v222 = vpop.f32.mrb[0].mxu0
    %v223 = vadd.f32 %v154, %v222
    %v224 = vpop.f32.mrb[0].mxu0
    %v225 = vadd.f32 %v154, %v224
    %v226 = vpop.f32.mrb[0].mxu0
    %v227 = vadd.f32 %v159, %v226
    %v228 = vpop.f32.mrb[0].mxu0
    %v229 = vadd.f32 %v159, %v228
    %230 = vdwg.mxu0
    %231 = vmatprep.subr.bf16.mxu0 %v88
    %232 = vmatpush1.bf16.msra.mxu0 %v87
    %233 = vmatprep.subr.bf16.mxu0 %v92
    %234 = vmatpush1.bf16.msra.mxu0 %v91
    %235 = vmatprep.subr.bf16.mxu0 0
    %236 = vmatpush1.bf16.msra.mxu0 0
    %237 = vmatprep.subr.bf16.mxu0 0
    %238 = vmatpush1.bf16.msra.mxu0 0
    %239 = vmatprep.subr.bf16.mxu0 0
    %240 = vmatpush1.bf16.msra.mxu0 0
    %241 = vmatprep.subr.bf16.mxu0 0
    %242 = vmatpush1.bf16.msra.mxu0 0
    %243 = vmatprep.subr.bf16.mxu0 0
    %244 = vmatpush1.bf16.msra.mxu0 0
    %245 = vmatprep.subr.bf16.mxu0 0
    %246 = vmatpush1.bf16.msra.mxu0 0
    %247 = vmatprep.subr.bf16.mxu0 0
    %248 = vmatpush1.bf16.msra.mxu0 0
    %249 = vmatprep.subr.bf16.mxu0 0
    %250 = vmatpush1.bf16.msra.mxu0 0
    %251 = vmatprep.subr.bf16.mxu0 0
    %252 = vmatpush1.bf16.msra.mxu0 0
    %253 = vmatprep.subr.bf16.mxu0 0
    %254 = vmatpush1.bf16.msra.mxu0 0
    %255 = vmatprep.subr.bf16.mxu0 0
    %256 = vmatpush1.bf16.msra.mxu0 0
    %257 = vmatprep.subr.bf16.mxu0 0
    %258 = vmatpush1.bf16.msra.mxu0 0
    %259 = vmatprep.subr.bf16.mxu0 0
    %260 = vmatpush1.bf16.msra.mxu0 0
    %261 = vmatprep.subr.bf16.mxu0 0
    %262 = vmatpush1.bf16.msra.mxu0 0
    %263 = vmatprep.mubr.bf16.mxu0 0
    %264 = vmatmul.mubr.bf16.gmra.mrb[0].mxu0 %v173
    %v265 = vpop.f32.mrb[0].mxu0
    %v266 = vadd.f32 %v144, %v265
    %v267 = vpop.f32.mrb[0].mxu0
    %v268 = vadd.f32 %v144, %v267
    %v269 = vpop.f32.mrb[0].mxu0
    %v270 = vadd.f32 %v149, %v269
    %v271 = vpop.f32.mrb[0].mxu0
    %v272 = vadd.f32 %v149, %v271
    %273 = vmatprep.mubr.bf16.mxu0 0
    %274 = vmatmul.mubr.bf16.gmra.mrb[0].mxu0 %v176
    %v275 = vpop.f32.mrb[0].mxu0
    %v276 = vadd.f32 %v154, %v275
    %v277 = vpop.f32.mrb[0].mxu0
    %v278 = vadd.f32 %v154, %v277
    %v279 = vpop.f32.mrb[0].mxu0
    %v280 = vadd.f32 %v159, %v279
    %v281 = vpop.f32.mrb[0].mxu0
    %v282 = vadd.f32 %v159, %v281
    %283 = vdwg.mxu0
    %284 = vmatprep.subr.bf16.mxu0 %v126
    %285 = vmatpush1.bf16.msra.mxu0 %v125
    %286 = vmatprep.subr.bf16.mxu0 %v130
    %287 = vmatpush1.bf16.msra.mxu0 %v129
    %288 = vmatprep.subr.bf16.mxu0 0
    %289 = vmatpush1.bf16.msra.mxu0 0
    %290 = vmatprep.subr.bf16.mxu0 0
    %291 = vmatpush1.bf16.msra.mxu0 0
    %292 = vmatprep.subr.bf16.mxu0 0
    %293 = vmatpush1.bf16.msra.mxu0 0
    %294 = vmatprep.subr.bf16.mxu0 0
    %295 = vmatpush1.bf16.msra.mxu0 0
    %296 = vmatprep.subr.bf16.mxu0 0
    %297 = vmatpush1.bf16.msra.mxu0 0
    %298 = vmatprep.subr.bf16.mxu0 0
    %299 = vmatpush1.bf16.msra.mxu0 0
    %300 = vmatprep.subr.bf16.mxu0 0
    %301 = vmatpush1.bf16.msra.mxu0 0
    %302 = vmatprep.subr.bf16.mxu0 0
    %303 = vmatpush1.bf16.msra.mxu0 0
    %304 = vmatprep.subr.bf16.mxu0 0
    %305 = vmatpush1.bf16.msra.mxu0 0
    %306 = vmatprep.subr.bf16.mxu0 0
    %307 = vmatpush1.bf16.msra.mxu0 0
    %308 = vmatprep.subr.bf16.mxu0 0
    %309 = vmatpush1.bf16.msra.mxu0 0
    %310 = vmatprep.subr.bf16.mxu0 0
    %311 = vmatpush1.bf16.msra.mxu0 0
    %312 = vmatprep.subr.bf16.mxu0 0
    %313 = vmatpush1.bf16.msra.mxu0 0
    %314 = vmatprep.subr.bf16.mxu0 0
    %315 = vmatpush1.bf16.msra.mxu0 0
    %316 = vmatprep.mubr.bf16.mxu0 0
    %317 = vmatmul.mubr.bf16.gmra.mrb[0].mxu0 %v173
    %v318 = vpop.f32.mrb[0].mxu0
    %v319 = vadd.f32 %v144, %v318
    %v320 = vpop.f32.mrb[0].mxu0
    %v321 = vadd.f32 %v144, %v320
    %v322 = vpop.f32.mrb[0].mxu0
    %v323 = vadd.f32 %v149, %v322
    %v324 = vpop.f32.mrb[0].mxu0
    %v325 = vadd.f32 %v149, %v324
    %326 = vmatprep.mubr.bf16.mxu0 0
    %327 = vmatmul.mubr.bf16.gmra.mrb[0].mxu0 %v176
    %v328 = vpop.f32.mrb[0].mxu0
    %v329 = vadd.f32 %v154, %v328
    %v330 = vpop.f32.mrb[0].mxu0
    %v331 = vadd.f32 %v154, %v330
    %v332 = vpop.f32.mrb[0].mxu0
    %v333 = vadd.f32 %v159, %v332
    %v334 = vpop.f32.mrb[0].mxu0
    %v335 = vadd.f32 %v159, %v334
    %336 = vdwg.mxu0
    %337 = vmatprep.subr.bf16.mxu0 %v128
    %338 = vmatpush1.bf16.msra.mxu0 %v127
    %339 = vmatprep.subr.bf16.mxu0 %v132
    %340 = vmatpush1.bf16.msra.mxu0 %v131
    %341 = vmatprep.subr.bf16.mxu0 0
    %342 = vmatpush1.bf16.msra.mxu0 0
    %343 = vmatprep.subr.bf16.mxu0 0
    %344 = vmatpush1.bf16.msra.mxu0 0
    %345 = vmatprep.subr.bf16.mxu0 0
    %346 = vmatpush1.bf16.msra.mxu0 0
    %347 = vmatprep.subr.bf16.mxu0 0
    %348 = vmatpush1.bf16.msra.mxu0 0
    %349 = vmatprep.subr.bf16.mxu0 0
    %350 = vmatpush1.bf16.msra.mxu0 0
    %351 = vmatprep.subr.bf16.mxu0 0
    %352 = vmatpush1.bf16.msra.mxu0 0
    %353 = vmatprep.subr.bf16.mxu0 0
    %354 = vmatpush1.bf16.msra.mxu0 0
    %355 = vmatprep.subr.bf16.mxu0 0
    %356 = vmatpush1.bf16.msra.mxu0 0
    %357 = vmatprep.subr.bf16.mxu0 0
    %358 = vmatpush1.bf16.msra.mxu0 0
    %359 = vmatprep.subr.bf16.mxu0 0
    %360 = vmatpush1.bf16.msra.mxu0 0
    %361 = vmatprep.subr.bf16.mxu0 0
    %362 = vmatpush1.bf16.msra.mxu0 0
    %363 = vmatprep.subr.bf16.mxu0 0
    %364 = vmatpush1.bf16.msra.mxu0 0
    %365 = vmatprep.subr.bf16.mxu0 0
    %366 = vmatpush1.bf16.msra.mxu0 0
    %367 = vmatprep.subr.bf16.mxu0 0
    %368 = vmatpush1.bf16.msra.mxu0 0
    %369 = vmatprep.mubr.bf16.mxu0 0
    %370 = vmatmul.mubr.bf16.gmra.mrb[0].mxu0 %v173
    %v371 = vpop.f32.mrb[0].mxu0
    %v372 = vadd.f32 %v144, %v371
    %v373 = vpop.f32.mrb[0].mxu0
    %v374 = vadd.f32 %v144, %v373
    %v375 = vpop.f32.mrb[0].mxu0
    %v376 = vadd.f32 %v149, %v375
    %v377 = vpop.f32.mrb[0].mxu0
    %v378 = vadd.f32 %v149, %v377
    %379 = vmatprep.mubr.bf16.mxu0 0
    %380 = vmatmul.mubr.bf16.gmra.mrb[0].mxu0 %v176
    %v381 = vpop.f32.mrb[0].mxu0
    %v382 = vadd.f32 %v154, %v381
    %v383 = vpop.f32.mrb[0].mxu0
    %v384 = vadd.f32 %v154, %v383
    %v385 = vpop.f32.mrb[0].mxu0
    %v386 = vadd.f32 %v159, %v385
    %v387 = vpop.f32.mrb[0].mxu0
    %v388 = vadd.f32 %v159, %v387
    %389 = vdwg.mxu0
    %390 = vst [vmem:[#allocation5] sm:$0xff] %v213
    %391 = vst [vmem:[#allocation5 + $0x8] sm:$0xff] %v215
    %392 = vst [vmem:[#allocation5 + $0x10] sm:$0xff] %v266
    %393 = vst [vmem:[#allocation5 + $0x18] sm:$0xff] %v268
    %394 = vst [vmem:[#allocation5 + $0x20] sm:$0xff] %v217
    %395 = vst [vmem:[#allocation5 + $0x28] sm:$0xff] %v219
    %396 = vst [vmem:[#allocation5 + $0x30] sm:$0xff] %v270
    %397 = vst [vmem:[#allocation5 + $0x38] sm:$0xff] %v272
    %398 = vst [vmem:[#allocation5 + $0x40] sm:$0xff] %v223
    %399 = vst [vmem:[#allocation5 + $0x48] sm:$0xff] %v225
    %400 = vst [vmem:[#allocation5 + $0x50] sm:$0xff] %v276
    %401 = vst [vmem:[#allocation5 + $0x58] sm:$0xff] %v278
    %402 = vst [vmem:[#allocation5 + $0x60] sm:$0xff] %v227
    %403 = vst [vmem:[#allocation5 + $0x68] sm:$0xff] %v229
    %404 = vst [vmem:[#allocation5 + $0x70] sm:$0xff] %v280
    %405 = vst [vmem:[#allocation5 + $0x78] sm:$0xff] %v282
    %v406 = vadd.f32 %v213, %v217
    %v407 = vadd.f32 %v406, %v223
    %v408 = vadd.f32 %v407, %v227
    %v409 = vrot.slane %v408, 4
    %v410 = vadd.f32 %v408, %v409
    %v411 = vrot.slane %v410, 2
    %v412 = vadd.f32 %v410, %v411
    %v413 = vrot.slane %v412, 1
    %v414 = vadd.f32 %v412, %v413
    %v415 = vadd.f32 %v215, %v219
    %v416 = vadd.f32 %v415, %v225
    %v417 = vadd.f32 %v416, %v229
    %v418 = vrot.slane %v417, 4
    %v419 = vadd.f32 %v417, %v418
    %v420 = vrot.slane %v419, 2
    %v421 = vadd.f32 %v419, %v420
    %v422 = vrot.slane %v421, 1
    %v423 = vadd.f32 %v421, %v422
    %v424 = vadd.f32 %v266, %v270
    %v425 = vadd.f32 %v424, %v276
    %v426 = vadd.f32 %v425, %v280
    %v427 = vrot.slane %v426, 4
    %v428 = vadd.f32 %v426, %v427
    %v429 = vrot.slane %v428, 2
    %v430 = vadd.f32 %v428, %v429
    %v431 = vrot.slane %v430, 1
    %v432 = vadd.f32 %v430, %v431
    %v433 = vadd.f32 %v268, %v272
    %v434 = vadd.f32 %v433, %v278
    %v435 = vadd.f32 %v434, %v282
    %v436 = vrot.slane %v435, 4
    %v437 = vadd.f32 %v435, %v436
    %v438 = vrot.slane %v437, 2
    %v439 = vadd.f32 %v437, %v438
    %v440 = vrot.slane %v439, 1
    %v441 = vadd.f32 %v439, %v440
    %v442 = vadd.f32 %v414, 0.0
    %v443 = vadd.f32 %v423, 0.0
    %v444 = vadd.f32 %v432, 0.0
    %v445 = vadd.f32 %v441, 0.0
    %v446 = vmul.f32 %v213, %v213
    %v447 = vmul.f32 %v215, %v215
    %v448 = vmul.f32 %v266, %v266
    %v449 = vmul.f32 %v268, %v268
    %v450 = vmul.f32 %v217, %v217
    %v451 = vmul.f32 %v219, %v219
    %v452 = vmul.f32 %v270, %v270
    %v453 = vmul.f32 %v272, %v272
    %v454 = vmul.f32 %v223, %v223
    %v455 = vmul.f32 %v225, %v225
    %v456 = vmul.f32 %v276, %v276
    %v457 = vmul.f32 %v278, %v278
    %v458 = vmul.f32 %v227, %v227
    %v459 = vmul.f32 %v229, %v229
    %v460 = vmul.f32 %v280, %v280
    %v461 = vmul.f32 %v282, %v282
    %v462 = vadd.f32 %v446, %v450
    %v463 = vadd.f32 %v462, %v454
    %v464 = vadd.f32 %v463, %v458
    %v465 = vrot.slane %v464, 4
    %v466 = vadd.f32 %v464, %v465
    %v467 = vrot.slane %v466, 2
    %v468 = vadd.f32 %v466, %v467
    %v469 = vrot.slane %v468, 1
    %v470 = vadd.f32 %v468, %v469
    %v471 = vadd.f32 %v447, %v451
    %v472 = vadd.f32 %v471, %v455
    %v473 = vadd.f32 %v472, %v459
    %v474 = vrot.slane %v473, 4
    %v475 = vadd.f32 %v473, %v474
    %v476 = vrot.slane %v475, 2
    %v477 = vadd.f32 %v475, %v476
    %v478 = vrot.slane %v477, 1
    %v479 = vadd.f32 %v477, %v478
    %v480 = vadd.f32 %v448, %v452
    %v481 = vadd.f32 %v480, %v456
    %v482 = vadd.f32 %v481, %v460
    %v483 = vrot.slane %v482, 4
    %v484 = vadd.f32 %v482, %v483
    %v485 = vrot.slane %v484, 2
    %v486 = vadd.f32 %v484, %v485
    %v487 = vrot.slane %v486, 1
    %v488 = vadd.f32 %v486, %v487
    %v489 = vadd.f32 %v449, %v453
    %v490 = vadd.f32 %v489, %v457
    %v491 = vadd.f32 %v490, %v461
    %v492 = vrot.slane %v491, 4
    %v493 = vadd.f32 %v491, %v492
    %v494 = vrot.slane %v493, 2
    %v495 = vadd.f32 %v493, %v494
    %v496 = vrot.slane %v495, 1
    %v497 = vadd.f32 %v495, %v496
    %v498 = vadd.f32 %v470, 0.0
    %v499 = vadd.f32 %v479, 0.0
    %v500 = vadd.f32 %v488, 0.0
    %v501 = vadd.f32 %v497, 0.0
    %s502 = scalar_lea.vmem [#allocation5], 128
    %503 = vst [vmem:[%s502] sm:$0xff] %v319
    %504 = vst [vmem:[%s502 + $0x8] sm:$0xff] %v321
    %505 = vst [vmem:[%s502 + $0x10] sm:$0xff] %v372
    %506 = vst [vmem:[%s502 + $0x18] sm:$0xff] %v374
    %507 = vst [vmem:[%s502 + $0x20] sm:$0xff] %v323
    %508 = vst [vmem:[%s502 + $0x28] sm:$0xff] %v325
    %509 = vst [vmem:[%s502 + $0x30] sm:$0xff] %v376
    %510 = vst [vmem:[%s502 + $0x38] sm:$0xff] %v378
    %511 = vst [vmem:[%s502 + $0x40] sm:$0xff] %v329
    %512 = vst [vmem:[%s502 + $0x48] sm:$0xff] %v331
    %513 = vst [vmem:[%s502 + $0x50] sm:$0xff] %v382
    %514 = vst [vmem:[%s502 + $0x58] sm:$0xff] %v384
    %515 = vst [vmem:[%s502 + $0x60] sm:$0xff] %v333
    %516 = vst [vmem:[%s502 + $0x68] sm:$0xff] %v335
    %517 = vst [vmem:[%s502 + $0x70] sm:$0xff] %v386
    %518 = vst [vmem:[%s502 + $0x78] sm:$0xff] %v388
    %v519 = vadd.f32 %v319, %v323
    %v520 = vadd.f32 %v519, %v329
    %v521 = vadd.f32 %v520, %v333
    %v522 = vrot.slane %v521, 4
    %v523 = vadd.f32 %v521, %v522
    %v524 = vrot.slane %v523, 2
    %v525 = vadd.f32 %v523, %v524
    %v526 = vrot.slane %v525, 1
    %v527 = vadd.f32 %v525, %v526
    %v528 = vadd.f32 %v321, %v325
    %v529 = vadd.f32 %v528, %v331
    %v530 = vadd.f32 %v529, %v335
    %v531 = vrot.slane %v530, 4
    %v532 = vadd.f32 %v530, %v531
    %v533 = vrot.slane %v532, 2
    %v534 = vadd.f32 %v532, %v533
    %v535 = vrot.slane %v534, 1
    %v536 = vadd.f32 %v534, %v535
    %v537 = vadd.f32 %v372, %v376
    %v538 = vadd.f32 %v537, %v382
    %v539 = vadd.f32 %v538, %v386
    %v540 = vrot.slane %v539, 4
    %v541 = vadd.f32 %v539, %v540
    %v542 = vrot.slane %v541, 2
    %v543 = vadd.f32 %v541, %v542
    %v544 = vrot.slane %v543, 1
    %v545 = vadd.f32 %v543, %v544
    %v546 = vadd.f32 %v374, %v378
    %v547 = vadd.f32 %v546, %v384
    %v548 = vadd.f32 %v547, %v388
    %v549 = vrot.slane %v548, 4
    %v550 = vadd.f32 %v548, %v549
    %v551 = vrot.slane %v550, 2
    %v552 = vadd.f32 %v550, %v551
    %v553 = vrot.slane %v552, 1
    %v554 = vadd.f32 %v552, %v553
    %v555 = vadd.f32 %v442, %v527
    %v556 = vadd.f32 %v443, %v536
    %v557 = vadd.f32 %v444, %v545
    %v558 = vadd.f32 %v445, %v554
    %v559 = vmul.f32 %v319, %v319
    %v560 = vmul.f32 %v321, %v321
    %v561 = vmul.f32 %v372, %v372
    %v562 = vmul.f32 %v374, %v374
    %v563 = vmul.f32 %v323, %v323
    %v564 = vmul.f32 %v325, %v325
    %v565 = vmul.f32 %v376, %v376
    %v566 = vmul.f32 %v378, %v378
    %v567 = vmul.f32 %v329, %v329
    %v568 = vmul.f32 %v331, %v331
    %v569 = vmul.f32 %v382, %v382
    %v570 = vmul.f32 %v384, %v384
    %v571 = vmul.f32 %v333, %v333
    %v572 = vmul.f32 %v335, %v335
    %v573 = vmul.f32 %v386, %v386
    %v574 = vmul.f32 %v388, %v388
    %v575 = vadd.f32 %v559, %v563
    %v576 = vadd.f32 %v575, %v567
    %v577 = vadd.f32 %v576, %v571
    %v578 = vrot.slane %v577, 4
    %v579 = vadd.f32 %v577, %v578
    %v580 = vrot.slane %v579, 2
    %v581 = vadd.f32 %v579, %v580
    %v582 = vrot.slane %v581, 1
    %v583 = vadd.f32 %v581, %v582
    %v584 = vadd.f32 %v560, %v564
    %v585 = vadd.f32 %v584, %v568
    %v586 = vadd.f32 %v585, %v572
    %v587 = vrot.slane %v586, 4
    %v588 = vadd.f32 %v586, %v587
    %v589 = vrot.slane %v588, 2
    %v590 = vadd.f32 %v588, %v589
    %v591 = vrot.slane %v590, 1
    %v592 = vadd.f32 %v590, %v591
    %v593 = vadd.f32 %v561, %v565
    %v594 = vadd.f32 %v593, %v569
    %v595 = vadd.f32 %v594, %v573
    %v596 = vrot.slane %v595, 4
    %v597 = vadd.f32 %v595, %v596
    %v598 = vrot.slane %v597, 2
    %v599 = vadd.f32 %v597, %v598
    %v600 = vrot.slane %v599, 1
    %v601 = vadd.f32 %v599, %v600
    %v602 = vadd.f32 %v562, %v566
    %v603 = vadd.f32 %v602, %v570
    %v604 = vadd.f32 %v603, %v574
    %v605 = vrot.slane %v604, 4
    %v606 = vadd.f32 %v604, %v605
    %v607 = vrot.slane %v606, 2
    %v608 = vadd.f32 %v606, %v607
    %v609 = vrot.slane %v608, 1
    %v610 = vadd.f32 %v608, %v609
    %v611 = vadd.f32 %v498, %v583
    %v612 = vadd.f32 %v499, %v592
    %v613 = vadd.f32 %v500, %v601
    %v614 = vadd.f32 %v501, %v610
    %v615 = vmul.f32 %v555, 0.015625
    %v616 = vmul.f32 %v556, 0.015625
    %v617 = vmul.f32 %v557, 0.015625
    %v618 = vmul.f32 %v558, 0.015625
    %v619 = vmul.f32 %v611, 0.015625
    %v620 = vmul.f32 %v612, 0.015625
    %v621 = vmul.f32 %v613, 0.015625
    %v622 = vmul.f32 %v614, 0.015625
    %v623 = vmul.f32 %v615, %v615
    %v624 = vmul.f32 %v616, %v616
    %v625 = vmul.f32 %v617, %v617
    %v626 = vmul.f32 %v618, %v618
    %v627 = vsub.f32 %v619, %v623
    %v628 = vsub.f32 %v620, %v624
    %v629 = vsub.f32 %v621, %v625
    %v630 = vsub.f32 %v622, %v626
    %v631 = vadd.f32 %v627, 1e-05
    %v632 = vadd.f32 %v628, 1e-05
    %v633 = vadd.f32 %v629, 1e-05
    %v634 = vadd.f32 %v630, 1e-05
    %v635 = vrsqrt.pop %v631
    %v636 = vrsqrt.pop %v632
    %v637 = vrsqrt.pop %v633
    %v638 = vrsqrt.pop %v634
    %v639 = vld [vmem:[%s3] sm:$0xf]
    %v644 = vcombine.low %v635, %v636
    %v645 = vcombine.low %v637, %v638
    %v647 = vunpack.c.l.s4 1966171168
    %v648 = vunpack.c.0.s8 %v647
    %v649 = vlaneseq
    %v650 = vshrl.u32 %v649, 7
    %v651 = vsub.s32 %v648, %v650
    %v652 = vrot.slane %v644, %v651
    %v654 = vunpack.c.l.s4 1966171168
    %v655 = vunpack.c.0.s8 %v654
    %v656 = vlaneseq
    %v657 = vshrl.u32 %v656, 7
    %v658 = vsub.s32 %v655, %v657
    %v659 = vrot.slane %v645, %v658
    %v660 = vcombine.low %v652, %v659
    %v662 = vunpack.c.l.s4 1966171168
    %v663 = vunpack.c.0.s8 %v662
    %v664 = vlaneseq
    %v665 = vshrl.u32 %v664, 7
    %v666 = vsub.s32 %v663, %v665
    %v667 = vrot.slane %v660, %v666
    %v669 = vmul.f32 %v639, %v667
    %v670 = vld [vmem:[%s4] sm:$0xf]
    %v672 = vlaneseq
    %v673 = vshrl.u32 %v672, 7
    %v674 = vsub.s32 0, %v673
    %v675 = vrot.slane %v669, %v674
    %v676 = vlaneseq
    %v677 = vshrl.u32 %v676, 7
    %v678 = vsub.s32 1, %v677
    %v679 = vrot.slane %v669, %v678
    %v680 = vlaneseq
    %v681 = vshrl.u32 %v680, 7
    %v682 = vsub.s32 2, %v681
    %v683 = vrot.slane %v669, %v682
    %v684 = vlaneseq
    %v685 = vshrl.u32 %v684, 7
    %v686 = vsub.s32 3, %v685
    %v687 = vrot.slane %v669, %v686
    %v692 = vmul.f32 %v615, %v675
    %v693 = vmul.f32 %v616, %v679
    %v694 = vmul.f32 %v617, %v683
    %v695 = vmul.f32 %v618, %v687
    %v700 = vcombine.low %v692, %v693
    %v701 = vcombine.low %v694, %v695
    %v703 = vunpack.c.l.s4 1966171168
    %v704 = vunpack.c.0.s8 %v703
    %v705 = vlaneseq
    %v706 = vshrl.u32 %v705, 7
    %v707 = vsub.s32 %v704, %v706
    %v708 = vrot.slane %v700, %v707
    %v710 = vunpack.c.l.s4 1966171168
    %v711 = vunpack.c.0.s8 %v710
    %v712 = vlaneseq
    %v713 = vshrl.u32 %v712, 7
    %v714 = vsub.s32 %v711, %v713
    %v715 = vrot.slane %v701, %v714
    %v716 = vcombine.low %v708, %v715
    %v718 = vunpack.c.l.s4 1966171168
    %v719 = vunpack.c.0.s8 %v718
    %v720 = vlaneseq
    %v721 = vshrl.u32 %v720, 7
    %v722 = vsub.s32 %v719, %v721
    %v723 = vrot.slane %v716, %v722
    %v725 = vsub.f32 %v670, %v723
    %v726 = vld [vmem:[#allocation5] sm:$0xff]
    %v727 = vld [vmem:[#allocation5 + $0x8] sm:$0xff]
    %v728 = vld [vmem:[#allocation5 + $0x10] sm:$0xff]
    %v729 = vld [vmem:[#allocation5 + $0x18] sm:$0xff]
    %v730 = vld [vmem:[#allocation5 + $0x20] sm:$0xff]
    %v731 = vld [vmem:[#allocation5 + $0x28] sm:$0xff]
    %v732 = vld [vmem:[#allocation5 + $0x30] sm:$0xff]
    %v733 = vld [vmem:[#allocation5 + $0x38] sm:$0xff]
    %v734 = vld [vmem:[#allocation5 + $0x40] sm:$0xff]
    %v735 = vld [vmem:[#allocation5 + $0x48] sm:$0xff]
    %v736 = vld [vmem:[#allocation5 + $0x50] sm:$0xff]
    %v737 = vld [vmem:[#allocation5 + $0x58] sm:$0xff]
    %v738 = vld [vmem:[#allocation5 + $0x60] sm:$0xff]
    %v739 = vld [vmem:[#allocation5 + $0x68] sm:$0xff]
    %v740 = vld [vmem:[#allocation5 + $0x70] sm:$0xff]
    %v741 = vld [vmem:[#allocation5 + $0x78] sm:$0xff]
    %v742 = vmul.f32 %v726, %v675
    %v743 = vmul.f32 %v727, %v679
    %v744 = vmul.f32 %v728, %v683
    %v745 = vmul.f32 %v729, %v687
    %v746 = vmul.f32 %v730, %v675
    %v747 = vmul.f32 %v731, %v679
    %v748 = vmul.f32 %v732, %v683
    %v749 = vmul.f32 %v733, %v687
    %v750 = vmul.f32 %v734, %v675
    %v751 = vmul.f32 %v735, %v679
    %v752 = vmul.f32 %v736, %v683
    %v753 = vmul.f32 %v737, %v687
    %v754 = vmul.f32 %v738, %v675
    %v755 = vmul.f32 %v739, %v679
    %v756 = vmul.f32 %v740, %v683
    %v757 = vmul.f32 %v741, %v687
    %v759 = vlaneseq
    %v760 = vshrl.u32 %v759, 7
    %v761 = vsub.s32 0, %v760
    %v762 = vrot.slane %v725, %v761
    %v763 = vlaneseq
    %v764 = vshrl.u32 %v763, 7
    %v765 = vsub.s32 1, %v764
    %v766 = vrot.slane %v725, %v765
    %v767 = vlaneseq
    %v768 = vshrl.u32 %v767, 7
    %v769 = vsub.s32 2, %v768
    %v770 = vrot.slane %v725, %v769
    %v771 = vlaneseq
    %v772 = vshrl.u32 %v771, 7
    %v773 = vsub.s32 3, %v772
    %v774 = vrot.slane %v725, %v773
    %v779 = vadd.f32 %v742, %v762
    %v780 = vadd.f32 %v743, %v766
    %v781 = vadd.f32 %v744, %v770
    %v782 = vadd.f32 %v745, %v774
    %v783 = vadd.f32 %v746, %v762
    %v784 = vadd.f32 %v747, %v766
    %v785 = vadd.f32 %v748, %v770
    %v786 = vadd.f32 %v749, %v774
    %v787 = vadd.f32 %v750, %v762
    %v788 = vadd.f32 %v751, %v766
    %v789 = vadd.f32 %v752, %v770
    %v790 = vadd.f32 %v753, %v774
    %v791 = vadd.f32 %v754, %v762
    %v792 = vadd.f32 %v755, %v766
    %v793 = vadd.f32 %v756, %v770
    %v794 = vadd.f32 %v757, %v774
    %795 = vst [vmem:[#allocation5] sm:$0xff] %v779
    %796 = vst [vmem:[#allocation5 + $0x8] sm:$0xff] %v780
    %797 = vst [vmem:[#allocation5 + $0x10] sm:$0xff] %v781
    %798 = vst [vmem:[#allocation5 + $0x18] sm:$0xff] %v782
    %799 = vst [vmem:[#allocation5 + $0x20] sm:$0xff] %v783
    %800 = vst [vmem:[#allocation5 + $0x28] sm:$0xff] %v784
    %801 = vst [vmem:[#allocation5 + $0x30] sm:$0xff] %v785
    %802 = vst [vmem:[#allocation5 + $0x38] sm:$0xff] %v786
    %803 = vst [vmem:[#allocation5 + $0x40] sm:$0xff] %v787
    %804 = vst [vmem:[#allocation5 + $0x48] sm:$0xff] %v788
    %805 = vst [vmem:[#allocation5 + $0x50] sm:$0xff] %v789
    %806 = vst [vmem:[#allocation5 + $0x58] sm:$0xff] %v790
    %807 = vst [vmem:[#allocation5 + $0x60] sm:$0xff] %v791
    %808 = vst [vmem:[#allocation5 + $0x68] sm:$0xff] %v792
    %809 = vst [vmem:[#allocation5 + $0x70] sm:$0xff] %v793
    %810 = vst [vmem:[#allocation5 + $0x78] sm:$0xff] %v794
    %v811 = vld [vmem:[%s502] sm:$0xff]
    %v812 = vld [vmem:[%s502 + $0x8] sm:$0xff]
    %v813 = vld [vmem:[%s502 + $0x10] sm:$0xff]
    %v814 = vld [vmem:[%s502 + $0x18] sm:$0xff]
    %v815 = vld [vmem:[%s502 + $0x20] sm:$0xff]
    %v816 = vld [vmem:[%s502 + $0x28] sm:$0xff]
    %v817 = vld [vmem:[%s502 + $0x30] sm:$0xff]
    %v818 = vld [vmem:[%s502 + $0x38] sm:$0xff]
    %v819 = vld [vmem:[%s502 + $0x40] sm:$0xff]
    %v820 = vld [vmem:[%s502 + $0x48] sm:$0xff]
    %v821 = vld [vmem:[%s502 + $0x50] sm:$0xff]
    %v822 = vld [vmem:[%s502 + $0x58] sm:$0xff]
    %v823 = vld [vmem:[%s502 + $0x60] sm:$0xff]
    %v824 = vld [vmem:[%s502 + $0x68] sm:$0xff]
    %v825 = vld [vmem:[%s502 + $0x70] sm:$0xff]
    %v826 = vld [vmem:[%s502 + $0x78] sm:$0xff]
    %v827 = vmul.f32 %v811, %v675
    %v828 = vmul.f32 %v812, %v679
    %v829 = vmul.f32 %v813, %v683
    %v830 = vmul.f32 %v814, %v687
    %v831 = vmul.f32 %v815, %v675
    %v832 = vmul.f32 %v816, %v679
    %v833 = vmul.f32 %v817, %v683
    %v834 = vmul.f32 %v818, %v687
    %v835 = vmul.f32 %v819, %v675
    %v836 = vmul.f32 %v820, %v679
    %v837 = vmul.f32 %v821, %v683
    %v838 = vmul.f32 %v822, %v687
    %v839 = vmul.f32 %v823, %v675
    %v840 = vmul.f32 %v824, %v679
    %v841 = vmul.f32 %v825, %v683
    %v842 = vmul.f32 %v826, %v687
    %v843 = vadd.f32 %v827, %v762
    %v844 = vadd.f32 %v828, %v766
    %v845 = vadd.f32 %v829, %v770
    %v846 = vadd.f32 %v830, %v774
    %v847 = vadd.f32 %v831, %v762
    %v848 = vadd.f32 %v832, %v766
    %v849 = vadd.f32 %v833, %v770
    %v850 = vadd.f32 %v834, %v774
    %v851 = vadd.f32 %v835, %v762
    %v852 = vadd.f32 %v836, %v766
    %v853 = vadd.f32 %v837, %v770
    %v854 = vadd.f32 %v838, %v774
    %v855 = vadd.f32 %v839, %v762
    %v856 = vadd.f32 %v840, %v766
    %v857 = vadd.f32 %v841, %v770
    %v858 = vadd.f32 %v842, %v774
    %859 = vst [vmem:[%s502] sm:$0xff] %v843
    %860 = vst [vmem:[%s502 + $0x8] sm:$0xff] %v844
    %861 = vst [vmem:[%s502 + $0x10] sm:$0xff] %v845
    %862 = vst [vmem:[%s502 + $0x18] sm:$0xff] %v846
    %863 = vst [vmem:[%s502 + $0x20] sm:$0xff] %v847
    %864 = vst [vmem:[%s502 + $0x28] sm:$0xff] %v848
    %865 = vst [vmem:[%s502 + $0x30] sm:$0xff] %v849
    %866 = vst [vmem:[%s502 + $0x38] sm:$0xff] %v850
    %867 = vst [vmem:[%s502 + $0x40] sm:$0xff] %v851
    %868 = vst [vmem:[%s502 + $0x48] sm:$0xff] %v852
    %869 = vst [vmem:[%s502 + $0x50] sm:$0xff] %v853
    %870 = vst [vmem:[%s502 + $0x58] sm:$0xff] %v854
    %871 = vst [vmem:[%s502 + $0x60] sm:$0xff] %v855
    %872 = vst [vmem:[%s502 + $0x68] sm:$0xff] %v856
    %873 = vst [vmem:[%s502 + $0x70] sm:$0xff] %v857
    %874 = vst [vmem:[%s502 + $0x78] sm:$0xff] %v858
    // Predicated region
    $region26: #{tpu_custom_call.1} parent=1 // pred_check
      _
    $region27: #{tpu_custom_call.1} parent=1 // pred_check_branch
      %876 = sbr.rel (0) target = $region29
    $region28: #{tpu_custom_call.1} parent=1 // pred_region
      %s878 = ssub.s32 4096, 4096
      %879 = vsyncadd [#allocation4], %s878
      %s880 = sshll.u32 [#allocation5], 4
      %s881 = int_to_ptr.vmem [resolvable:$true] %s880
      %886 = dma.vmem_to_hbm [thread:$0]  %s881, 4096, %s5, [#allocation4], 512, 512, 32
    $region29: #{tpu_custom_call.1} parent=1 // pred_fallthru
      _
    // Predicated region
    $region30: #{tpu_custom_call.1} parent=1 // pred_check
      _
    $region31: #{tpu_custom_call.1} parent=1 // pred_check_branch
      %888 = sbr.rel (0) target = $region33
    $region32: #{tpu_custom_call.1} parent=1 // pred_region
      %889 = dma.done [#allocation4], 4096
    $region33: #{tpu_custom_call.1} parent=1 // pred_fallthru
      _
    %890 = vsyncpa [#allocation3], 1
    %891 = vsyncpa [#allocation4], 1

</llo_original>
